<compile_context>
chip_gen: v7x
topology: tpu7x:2x2x1
jax: 0.10.0
libtpu: 0.0.40
codegen_flags: <defaults>
</compile_context>

<pallas_src>
import functools

import jax
import jax.numpy as jnp
from jax.experimental import pallas as pl
from jax.experimental.pallas import tpu as pltpu

_NEG_INF = -1e30  # large-negative finite mask value (avoids inf-inf NaNs)


def _round_up(x, m):
    return (x + m - 1) // m * m


def _cdiv(a, b):
    return (a + b - 1) // b


def _lse_kernel(emb_ref, w_ref, lse_ref, m_scr, l_scr, *, valid_cols_last):
    # emb_ref: (tb, D)   activation dtype (f32 / bf16)
    # w_ref:   (D, tc)   weight dtype (f32 / bf16)
    # lse_ref: (tb, 1)   f32 per-row log-sum-exp (written only on last class tile)
    # m_scr/l_scr: (tb, 1) f32 running max / running sum-exp
    k = pl.program_id(1)
    nk = pl.num_programs(1)

    @pl.when(k == 0)
    def _init():
        m_scr[...] = jnp.full(m_scr.shape, _NEG_INF, jnp.float32)
        l_scr[...] = jnp.zeros(l_scr.shape, jnp.float32)

    # MXU matmul, f32 accumulation regardless of operand dtype.
    logits = jnp.dot(emb_ref[...], w_ref[...], preferred_element_type=jnp.float32)
    tb, tc = logits.shape

    if valid_cols_last is not None:
        # Only emitted when C % tc != 0: mask the padded (out-of-bounds) columns
        # of the ragged last class tile.  Local iota, no k*tc broadcast add.
        col = jax.lax.broadcasted_iota(jnp.int32, (tb, tc), 1)
        limit = jnp.where(k == nk - 1, valid_cols_last, tc)
        logits = jnp.where(col < limit, logits, _NEG_INF)

    # Online (flash-style) log-sum-exp across class tiles.
    m_prev = m_scr[...]
    m_new = jnp.maximum(m_prev, jnp.max(logits, axis=-1, keepdims=True))
    alpha = jnp.exp(m_prev - m_new)
    p = jnp.exp(logits - m_new)
    l_scr[...] = alpha * l_scr[...] + jnp.sum(p, axis=-1, keepdims=True)
    m_scr[...] = m_new

    @pl.when(k == nk - 1)
    def _finalize():
        lse_ref[...] = m_scr[...] + jnp.log(l_scr[...])


def softmax_loss(embedding, W, labels, *, reduction="mean",
                 block_b=None, block_c=None, vmem_limit_bytes=None):
    """embedding: (B, D), W: (D, C), labels: (B,) int -> scalar (mean/sum) or (B,) ('none')."""
    B, D = embedding.shape
    Dw, C = W.shape
    assert D == Dw and labels.shape[0] == B

    emb_item = jnp.dtype(embedding.dtype).itemsize
    w_item = jnp.dtype(W.dtype).itemsize

    # ---- batch tile: big (arithmetic intensity ~ tb flop/byte against W streaming),
    #      but keep >= 2 batch tiles when B allows so the "parallel" axis can feed
    #      both v7x TensorCores.
    tb = 512 if block_b is None else int(block_b)
    tb = max(8, min(_round_up(tb, 8), _round_up(B, 8)))
    if _cdiv(B, tb) < 2 and B >= 16:
        tb = _round_up(_cdiv(B, 2), 8)
    nb = _cdiv(B, tb)
    B_pad = nb * tb

    # ---- class tile: sized against a 48 MiB VMEM budget (safe on v7x's 64 MiB/TC),
    #      including double-buffered blocks AND the f32 (tb, tc) intermediates.
    budget = 48 * 1024 * 1024
    fixed = 2 * tb * D * emb_item + 8 * tb * 4 + (2 << 20)   # emb dbl-buf + out/scratch + slack
    per_col = 2 * D * w_item + 4 * tb * 4                    # W dbl-buf + f32 temporaries per column
    tc_fit = max(128, (budget - fixed) // per_col)
    if block_c is not None:
        tc = max(128, _round_up(int(block_c), 128))
    else:
        tc_floor = 512 if w_item <= 2 else 256               # DMA-burst / step-overhead floor
        tc = max(tc_floor, (tc_fit // 128) * 128)
        tc = min(tc, 4096)
    if tc >= C:
        tc = C                                               # single class tile, no mask, no pad
    nc = _cdiv(C, tc)
    valid_cols_last = None if C % tc == 0 else C - (nc - 1) * tc

    # Only the (small) embedding is padded on batch; W is never padded/copied.
    emb_p = embedding if B_pad == B else jnp.pad(embedding, ((0, B_pad - B), (0, 0)))

    if vmem_limit_bytes is None:
        est = fixed + per_col * tc
        vmem_limit_bytes = max(32 << 20, min(int(est) + (2 << 20), budget))

    kernel = functools.partial(_lse_kernel, valid_cols_last=valid_cols_last)

    lse = pl.pallas_call(
        kernel,
        out_shape=jax.ShapeDtypeStruct((B_pad, 1), jnp.float32),
        grid_spec=pltpu.PrefetchScalarGridSpec(
            num_scalar_prefetch=0,
            grid=(nb, nc),
            in_specs=[
                pl.BlockSpec((tb, D), lambda i, k: (i, 0)),   # emb: resident across class sweep
                pl.BlockSpec((D, tc), lambda i, k: (0, k)),   # W: streamed class tiles
            ],
            out_specs=pl.BlockSpec((tb, 1), lambda i, k: (i, 0)),
            scratch_shapes=[pltpu.VMEM((tb, 1), jnp.float32),
                            pltpu.VMEM((tb, 1), jnp.float32)],
        ),
        compiler_params=pltpu.CompilerParams(
            dimension_semantics=("parallel", "arbitrary"),
            vmem_limit_bytes=int(vmem_limit_bytes),
        ),
    )(emb_p, W)

    lse = lse[:B, 0]

    # Target logit: O(B*D) gather + dot outside the class sweep (keeps the VPU out of
    # the kernel's steady state), computed in f32.
    w_target = jnp.take(W, labels.astype(jnp.int32), axis=1)            # (D, B)
    target = jnp.einsum("bd,db->b", embedding.astype(jnp.float32),
                        w_target.astype(jnp.float32))                   # (B,)
    per_row = lse - target

    if reduction == "mean":
        return jnp.sum(per_row) / B
    if reduction == "sum":
        return jnp.sum(per_row)
    return per_row  # reduction == 'none'


def init_softmax_loss_params(key, feature_dim, num_class):
    # Xavier normal init (gain=1): std = sqrt(2 / (fan_in + fan_out))
    std = (2.0 / (feature_dim + num_class)) ** 0.5
    return jax.random.normal(key, (feature_dim, num_class), dtype=jnp.float32) * std


def _reference_loss(embedding, W, labels):
    logits = embedding.astype(jnp.float32) @ W.astype(jnp.float32)
    lse = jax.scipy.special.logsumexp(logits, axis=-1)
    return jnp.mean(lse - logits[jnp.arange(embedding.shape[0]), labels])


if __name__ == "__main__":
    key = jax.random.PRNGKey(0)
    k_w, k_emb, k_lbl, k_w2, k_emb2, k_lbl2 = jax.random.split(key, 6)

    # --- small shapes consistent with the module (single class tile path) ---
    batch, feature_dim, num_class = 8, 32, 16
    W = init_softmax_loss_params(k_w, feature_dim, num_class)
    embedding = jax.random.normal(k_emb, (batch, feature_dim), dtype=jnp.float32)
    labels = jax.random.randint(k_lbl, (batch,), 0, num_class, dtype=jnp.int32)

    loss = softmax_loss(embedding, W, labels)
    jax.block_until_ready(loss)
    loss_ref = _reference_loss(embedding, W, labels)
    assert jnp.allclose(loss, loss_ref, atol=1e-5, rtol=1e-5), (loss, loss_ref)

    # bf16 operands into the MXU (f32 accumulation) — the intended production path.
    loss_bf16 = softmax_loss(embedding.astype(jnp.bfloat16), W.astype(jnp.bfloat16), labels)
    jax.block_until_ready(loss_bf16)
    assert jnp.allclose(loss_bf16, loss_ref, atol=5e-2, rtol=5e-2), (loss_bf16, loss_ref)

    # --- exercise the multi-tile path: >1 batch tile, ragged last class tile ---
    B2, D2, C2 = 24, 32, 300
    W2 = init_softmax_loss_params(k_w2, D2, C2)
    emb2 = jax.random.normal(k_emb2, (B2, D2), dtype=jnp.float32)
    lbl2 = jax.random.randint(k_lbl2, (B2,), 0, C2, dtype=jnp.int32)
    loss2 = softmax_loss(emb2, W2, lbl2, block_c=128)   # tc=128 -> nc=3, ragged last tile
    jax.block_until_ready(loss2)
    loss2_ref = _reference_loss(emb2, W2, lbl2)
    assert jnp.allclose(loss2, loss2_ref, atol=1e-5, rtol=1e-5), (loss2, loss2_ref)

    print("KERNEL_OK")
</pallas_src>

<mosaic_0001>
module attributes {stable_mosaic.version = 11 : i64} {
  func.func @_lse_kernel(%arg0: i32, %arg1: i32, %arg2: memref<8x32xf32, #tpu.memory_space<vmem>>, %arg3: memref<32x16xf32, #tpu.memory_space<vmem>>, %arg4: memref<8x1xf32, #tpu.memory_space<vmem>>, %arg5: memref<8x1xf32, #tpu.memory_space<vmem>>, %arg6: memref<8x1xf32, #tpu.memory_space<vmem>>) attributes {dimension_semantics = [#tpu.dimension_semantics<parallel>, #tpu.dimension_semantics<arbitrary>], iteration_bounds = array<i64: 1, 1>, scalar_prefetch = 0 : i64, scratch_operands = 2 : i64, tpu.core_type = #tpu.core_type<tc>, window_params = [{transform_indices = @transform_0, window_bounds = array<i64: 8, 32>}, {transform_indices = @transform_1, window_bounds = array<i64: 32, 16>}, {transform_indices = @transform_2, window_bounds = array<i64: 8, 1>}]} {
    %c0_i32 = arith.constant 0 : i32
    %0 = arith.cmpi eq, %arg1, %c0_i32 : i32
    %1 = arith.extui %0 : i1 to i32
    %c0_i32_0 = arith.constant 0 : i32
    %2 = arith.cmpi ne, %1, %c0_i32_0 : i32
    scf.if %2 {
      %cst_16 = arith.constant -1.000000e+30 : f32
      %25 = vector.broadcast %cst_16 : f32 to vector<8x1xf32>
      %c0_17 = arith.constant 0 : index
      %c0_18 = arith.constant 0 : index
      %26 = vector.load %arg5[%c0_17, %c0_18] : memref<8x1xf32, #tpu.memory_space<vmem>>, vector<8x1xf32>
      tpu.vector_store %arg5[%c0_17, %c0_18], %25 {strides = array<i32>} : memref<8x1xf32, #tpu.memory_space<vmem>>, vector<8x1xf32>,
      %cst_19 = arith.constant 0.000000e+00 : f32
      %27 = vector.broadcast %cst_19 : f32 to vector<8x1xf32>
      %c0_20 = arith.constant 0 : index
      %c0_21 = arith.constant 0 : index
      %28 = vector.load %arg6[%c0_20, %c0_21] : memref<8x1xf32, #tpu.memory_space<vmem>>, vector<8x1xf32>
      tpu.vector_store %arg6[%c0_20, %c0_21], %27 {strides = array<i32>} : memref<8x1xf32, #tpu.memory_space<vmem>>, vector<8x1xf32>,
    } else {
    }
    %c0 = arith.constant 0 : index
    %c0_1 = arith.constant 0 : index
    %3 = vector.load %arg2[%c0, %c0_1] : memref<8x32xf32, #tpu.memory_space<vmem>>, vector<8x32xf32>
    %c0_2 = arith.constant 0 : index
    %c0_3 = arith.constant 0 : index
    %4 = vector.load %arg3[%c0_2, %c0_3] : memref<32x16xf32, #tpu.memory_space<vmem>>, vector<32x16xf32>
    %cst = arith.constant dense<0.000000e+00> : vector<8x16xf32>
    %5 = tpu.matmul %3, %4, %cst {dimension_numbers = #tpu.dot_dimension_numbers<[1], [0], [0], [1], [0, 0, 1, 1], [], []>} : vector<8x32xf32>, vector<32x16xf32>, vector<8x16xf32> -> vector<8x16xf32>
    %c0_4 = arith.constant 0 : index
    %c0_5 = arith.constant 0 : index
    %6 = vector.load %arg5[%c0_4, %c0_5] : memref<8x1xf32, #tpu.memory_space<vmem>>, vector<8x1xf32>
    %cst_6 = arith.constant dense<0xFF800000> : vector<8xf32>
    %7 = vector.multi_reduction <maximumf>, %5, %cst_6 [1] : vector<8x16xf32> to vector<8xf32>
    %8 = vector.shape_cast %7 : vector<8xf32> to vector<8x1xf32>
    %9 = arith.maximumf %6, %8 : vector<8x1xf32>
    %10 = arith.subf %6, %9 : vector<8x1xf32>
    %11 = math.exp %10 : vector<8x1xf32>
    %12 = vector.broadcast %9 : vector<8x1xf32> to vector<8x16xf32>
    %13 = arith.subf %5, %12 : vector<8x16xf32>
    %14 = math.exp %13 : vector<8x16xf32>
    %c0_7 = arith.constant 0 : index
    %c0_8 = arith.constant 0 : index
    %15 = vector.load %arg6[%c0_7, %c0_8] : memref<8x1xf32, #tpu.memory_space<vmem>>, vector<8x1xf32>
    %16 = arith.mulf %11, %15 : vector<8x1xf32>
    %cst_9 = arith.constant dense<0.000000e+00> : vector<8xf32>
    %17 = vector.multi_reduction <add>, %14, %cst_9 [1] : vector<8x16xf32> to vector<8xf32>
    %18 = vector.shape_cast %17 : vector<8xf32> to vector<8x1xf32>
    %19 = arith.addf %16, %18 : vector<8x1xf32>
    %c0_10 = arith.constant 0 : index
    %c0_11 = arith.constant 0 : index
    %20 = vector.load %arg6[%c0_10, %c0_11] : memref<8x1xf32, #tpu.memory_space<vmem>>, vector<8x1xf32>
    tpu.vector_store %arg6[%c0_10, %c0_11], %19 {strides = array<i32>} : memref<8x1xf32, #tpu.memory_space<vmem>>, vector<8x1xf32>,
    %c0_12 = arith.constant 0 : index
    %c0_13 = arith.constant 0 : index
    %21 = vector.load %arg5[%c0_12, %c0_13] : memref<8x1xf32, #tpu.memory_space<vmem>>, vector<8x1xf32>
    tpu.vector_store %arg5[%c0_12, %c0_13], %9 {strides = array<i32>} : memref<8x1xf32, #tpu.memory_space<vmem>>, vector<8x1xf32>,
    %c0_i32_14 = arith.constant 0 : i32
    %22 = arith.cmpi eq, %arg1, %c0_i32_14 : i32
    %23 = arith.extui %22 : i1 to i32
    %c0_i32_15 = arith.constant 0 : i32
    %24 = arith.cmpi ne, %23, %c0_i32_15 : i32
    scf.if %24 {
      %c0_16 = arith.constant 0 : index
      %c0_17 = arith.constant 0 : index
      %25 = vector.load %arg5[%c0_16, %c0_17] : memref<8x1xf32, #tpu.memory_space<vmem>>, vector<8x1xf32>
      %c0_18 = arith.constant 0 : index
      %c0_19 = arith.constant 0 : index
      %26 = vector.load %arg6[%c0_18, %c0_19] : memref<8x1xf32, #tpu.memory_space<vmem>>, vector<8x1xf32>
      %27 = math.log %26 : vector<8x1xf32>
      %28 = arith.addf %25, %27 : vector<8x1xf32>
      %c0_20 = arith.constant 0 : index
      %c0_21 = arith.constant 0 : index
      %29 = vector.load %arg4[%c0_20, %c0_21] : memref<8x1xf32, #tpu.memory_space<vmem>>, vector<8x1xf32>
      tpu.vector_store %arg4[%c0_20, %c0_21], %28 {strides = array<i32>} : memref<8x1xf32, #tpu.memory_space<vmem>>, vector<8x1xf32>,
    } else {
    }
    return
  }
  func.func @transform_0(%arg0: i32, %arg1: i32) -> (i32, i32) {
    %c0_i32 = arith.constant 0 : i32
    %c0_i32_0 = arith.constant 0 : i32
    return %arg0, %c0_i32 : i32, i32
  }
  func.func @transform_1(%arg0: i32, %arg1: i32) -> (i32, i32) {
    %c0_i32 = arith.constant 0 : i32
    %c0_i32_0 = arith.constant 0 : i32
    return %c0_i32, %arg1 : i32, i32
  }
  func.func @transform_2(%arg0: i32, %arg1: i32) -> (i32, i32) {
    %c0_i32 = arith.constant 0 : i32
    %c0_i32_0 = arith.constant 0 : i32
    return %arg0, %c0_i32 : i32, i32
  }
}

</mosaic_0001>

<llo_original>
// kernel: tpu_custom_call.1
$region0: #{tpu_custom_call.1}
  #allocation0 [shape = 'u32[]', space=smem, size = 0x4, offset = 0x4, fixed_abs, tag = 'smem constant byte address 0x4 - core index']
  #allocation1 [shape = 'u32[144,128]{1,0:T(1,128)}', space=vmem, size = 0x12000, scoped, tag = 'internal scratch']
  #allocation2 [shape = 'f32[8,1]{1,0:T(8,128)}', space=vmem, size = 0x1000, scoped, tag = 'scratch operand']
  #allocation3 [shape = 'f32[8,1]{1,0:T(8,128)}', space=vmem, size = 0x1000, scoped, tag = 'scratch operand']
  %s0 = inlined_call_operand.vmem [shape: f32[8,32], index: 0, kind: input, shape index: {}]
  %s1 = inlined_call_operand.vmem [shape: f32[32,16], index: 1, kind: input, shape index: {}]
  %s2 = inlined_call_operand.vmem [shape: f32[8,1], index: 2, kind: output, shape index: {}]
  %s3 = sld [smem:[#allocation0]]
  $region26: #{tpu_custom_call.1} parent=0
    _
  %s5 = ssub.s32 1, %s3
  %s6 = scalar_select 0, %s5, %s3
  // Predicated region
  $region2: #{tpu_custom_call.1} parent=0 // pred_check
    _
  $region3: #{tpu_custom_call.1} parent=0 // pred_check_branch
    %8 = sbr.rel (0) target = $region5
  $region4: #{tpu_custom_call.1} parent=0 // pred_region
    _
  $region5: #{tpu_custom_call.1} parent=0 // pred_fallthru
    _
  // Predicated region
  $region6: #{tpu_custom_call.1} parent=0 // pred_check
    _
  $region7: #{tpu_custom_call.1} parent=0 // pred_check_branch
    %10 = sbr.rel (0) target = $region9
  $region8: #{tpu_custom_call.1} parent=0 // pred_region
    _
  $region9: #{tpu_custom_call.1} parent=0 // pred_fallthru
    _
  %p11 = scmp.eq.s32.totalorder 0, 0
  // Predicated region
  $region10: #{tpu_custom_call.1} parent=0 // pred_check
    %p12 = pneg %p11
  $region11: #{tpu_custom_call.1} parent=0 // pred_check_branch
    %14 = sbr.rel (%p12) target = $region13
  $region12: #{tpu_custom_call.1} parent=0 // pred_region
    %vm15 = vcmask 7168
    %16 = vst.msk [vmem:[#allocation2] sm:$0xff] %vm15, -1e+30
    %17 = vst.msk [vmem:[#allocation3] sm:$0xff] %vm15, 0.0
  $region13: #{tpu_custom_call.1} parent=0 // pred_fallthru
    _
  %v18 = vld [vmem:[%s0] sm:$0xff]
  %v19 = vld [vmem:[%s1] sm:$0xff]
  %v20 = vld [vmem:[%s1 + $0x8] sm:$0xff]
  %v21 = vld [vmem:[%s1 + $0x10] sm:$0xff]
  %v22 = vld [vmem:[%s1 + $0x18] sm:$0xff]
  %vm23 = vcmask 261120
  %v25 = vsel %vm23, %v18, 0
  %27 = vmatprep.subr.mxu0 0.0
  %28 = vmatpush1.msra.mxu0 %v19
  %29 = vmatprep.subr.mxu0 0.0
  %30 = vmatpush1.msra.mxu0 %v20
  %31 = vmatprep.subr.mxu0 0.0
  %32 = vmatpush1.msra.mxu0 %v21
  %33 = vmatprep.subr.mxu0 0.0
  %34 = vmatpush1.msra.mxu0 %v22
  %35 = vmatprep.subr.mxu0 0.0
  %36 = vmatpush1.msra.mxu0 0.0
  %37 = vmatprep.subr.mxu0 0.0
  %38 = vmatpush1.msra.mxu0 0.0
  %39 = vmatprep.subr.mxu0 0.0
  %40 = vmatpush1.msra.mxu0 0.0
  %41 = vmatprep.subr.mxu0 0.0
  %42 = vmatpush1.msra.mxu0 0.0
  %43 = vmatprep.subr.mxu0 0.0
  %44 = vmatpush1.msra.mxu0 0.0
  %45 = vmatprep.subr.mxu0 0.0
  %46 = vmatpush1.msra.mxu0 0.0
  %47 = vmatprep.subr.mxu0 0.0
  %48 = vmatpush1.msra.mxu0 0.0
  %49 = vmatprep.subr.mxu0 0.0
  %50 = vmatpush1.msra.mxu0 0.0
  %51 = vmatprep.subr.mxu0 0.0
  %52 = vmatpush1.msra.mxu0 0.0
  %53 = vmatprep.subr.mxu0 0.0
  %54 = vmatpush1.msra.mxu0 0.0
  %55 = vmatprep.subr.mxu0 0.0
  %56 = vmatpush1.msra.mxu0 0.0
  %57 = vmatprep.subr.mxu0 0.0
  %58 = vmatpush1.msra.mxu0 0.0
  %59 = vmatprep.subr.mxu0 0.0
  %60 = vmatpush1.msra.mxu0 0.0
  %61 = vmatprep.subr.mxu0 0.0
  %62 = vmatpush1.msra.mxu0 0.0
  %63 = vmatprep.subr.mxu0 0.0
  %64 = vmatpush1.msra.mxu0 0.0
  %65 = vmatprep.subr.mxu0 0.0
  %66 = vmatpush1.msra.mxu0 0.0
  %67 = vmatprep.subr.mxu0 0.0
  %68 = vmatpush1.msra.mxu0 0.0
  %69 = vmatprep.subr.mxu0 0.0
  %70 = vmatpush1.msra.mxu0 0.0
  %71 = vmatprep.subr.mxu0 0.0
  %72 = vmatpush1.msra.mxu0 0.0
  %73 = vmatprep.subr.mxu0 0.0
  %74 = vmatpush1.msra.mxu0 0.0
  %75 = vmatprep.subr.mxu0 0.0
  %76 = vmatpush1.msra.mxu0 0.0
  %77 = vmatprep.subr.mxu0 0.0
  %78 = vmatpush1.msra.mxu0 0.0
  %79 = vmatprep.subr.mxu0 0.0
  %80 = vmatpush1.msra.mxu0 0.0
  %81 = vmatprep.subr.mxu0 0.0
  %82 = vmatpush1.msra.mxu0 0.0
  %83 = vmatprep.subr.mxu0 0.0
  %84 = vmatpush1.msra.mxu0 0.0
  %85 = vmatprep.subr.mxu0 0.0
  %86 = vmatpush1.msra.mxu0 0.0
  %87 = vmatprep.subr.mxu0 0.0
  %88 = vmatpush1.msra.mxu0 0.0
  %89 = vmatprep.subr.mxu0 0.0
  %90 = vmatpush1.msra.mxu0 0.0
  %91 = vmatprep.mubr.f32.mxu0 0.0
  %92 = vmatmul.mubr.f32.gmra.mrb[0].mxu0 %v25
  %v93 = vpop.f32.mrb[0].mxu0
  %v94 = vadd.f32 0.0, %v93
  %v95 = vpop.f32.mrb[0].mxu0
  %96 = vdwg.mxu0
  %v97 = vld [vmem:[#allocation2] sm:$0xff]
  %vm98 = vcmask 130048
  %v99 = vsel %vm98, %v94, -inf
  %100 = vmax.xlane.f32.xlu0 %v99
  %v101 = vpop.xlane.xlu0 %100
  %v102 = vmax.f32 %v97, %v101
  %v103 = vsub.f32 %v97, %v102
  %v104 = vmul.f32 %v103, 1.442695
  %v105 = vpow.pop %v104
  %107 = vset.pattern.permute.xlu0 0
  %108 = vperm.xlu0 %107, %v102
  %v109 = vpop.permute.xlu0 %108
  %v111 = vsub.f32 %v94, %v109
  %v112 = vmul.f32 %v111, 1.442695
  %v113 = vpow.pop %v112
  %v114 = vld [vmem:[#allocation3] sm:$0xff]
  %v115 = vmul.f32 %v105, %v114
  %v116 = vsel %vm98, %v113, 0.0
  %117 = vadd.xlane.f32.xlu0 %v116
  %v118 = vpop.xlane.xlu0 %117
  %v119 = vadd.f32 %v115, %v118
  %vm120 = vcmask 7168
  %121 = vst.msk [vmem:[#allocation3] sm:$0xff] %vm120, %v119
  %122 = vst.msk [vmem:[#allocation2] sm:$0xff] %vm120, %v102
  // Predicated region
  $region14: #{tpu_custom_call.1} parent=0 // pred_check
    %p123 = pneg %p11
  $region15: #{tpu_custom_call.1} parent=0 // pred_check_branch
    %125 = sbr.rel (%p123) target = $region17
  $region16: #{tpu_custom_call.1} parent=0 // pred_region
    %v126 = vld [vmem:[#allocation2] sm:$0xff]
    %v127 = vld [vmem:[#allocation3] sm:$0xff]
    %v128 = vlog2.pop %v127
    %v129 = vmul.f32 %v128, 0.6931472
    %v130 = vadd.f32 %v126, %v129
    %131 = vst.msk [vmem:[%s2] sm:$0xff] %vm120, %v130
  $region17: #{tpu_custom_call.1} parent=0 // pred_fallthru
    _
  // Predicated region
  $region18: #{tpu_custom_call.1} parent=0 // pred_check
    _
  $region19: #{tpu_custom_call.1} parent=0 // pred_check_branch
    %133 = sbr.rel (0) target = $region21
  $region20: #{tpu_custom_call.1} parent=0 // pred_region
    _
  $region21: #{tpu_custom_call.1} parent=0 // pred_fallthru
    _
  // Predicated region
  $region22: #{tpu_custom_call.1} parent=0 // pred_check
    _
  $region23: #{tpu_custom_call.1} parent=0 // pred_check_branch
    %135 = sbr.rel (0) target = $region25
  $region24: #{tpu_custom_call.1} parent=0 // pred_region
    _
  $region25: #{tpu_custom_call.1} parent=0 // pred_fallthru
    _

</llo_original>
